<compile_context>
chip_gen: v7x
topology: tpu7x:2x2x1
jax: 0.10.0
libtpu: 0.0.40
codegen_flags: <defaults>
</compile_context>

<pallas_src>
import math
import functools

import jax
import jax.numpy as jnp
from jax.experimental import pallas as pl
from jax.experimental.pallas import tpu as pltpu


# ---------------------------------------------------------------------------
# Kernel
# ---------------------------------------------------------------------------
def _pos_embed_kernel(posy_ref, posx_ref, out_ref, *, N):
    """One grid step materializes rows [b*R, (b+1)*R) of the encoding.

    posy_ref: (R, N) or (R, 1, N) pos_y table rows for this block
    posx_ref: (W, N) pos_x table (same every step)
    out_ref : (R, W, 2N) output tile
    """
    R, W, C = out_ref.shape
    dt = out_ref.dtype

    posy = posy_ref[...].reshape(R, N)          # tolerate 2-D or 3-D layout
    posx = posx_ref[...]                        # (W, N)

    # TODO(synk): on v5e a stride-0 sublane-broadcast load could avoid
    # materializing the (R, W, N) posy temporary; on v6e/v7x it is hidden
    # under the HBM write DMA, so we keep the simple broadcast.
    posy_b = jnp.broadcast_to(posy[:, None, :], (R, W, N)).astype(dt)
    posx_b = jnp.broadcast_to(posx[None, :, :], (R, W, N)).astype(dt)

    if N % 128 == 0:
        # Both halves are lane-aligned unmasked slab stores.
        out_ref[:, :, :N] = posy_b
        out_ref[:, :, N:] = posx_b
    else:
        # A store at lane offset N (N not a multiple of 128) would lower to
        # masked vst + lane shuffles; build the full tile and store once.
        out_ref[...] = jnp.concatenate([posy_b, posx_b], axis=-1)


# ---------------------------------------------------------------------------
# Tiling heuristics
# ---------------------------------------------------------------------------
def _vmem_capacity_bytes():
    try:
        return int(pltpu.get_tpu_info().vmem_capacity_bytes)
    except Exception:
        return 64 << 20   # conservative (v7x per-TensorCore VMEM)


def _default_tile_budget(vmem_cap):
    # Double-buffered output (2x tile) + tiny inputs must stay well under the
    # scoped VMEM: 16 MiB tiles on 128 MiB chips (v5e/v6e), 8 MiB on v7x.
    return (16 << 20) if vmem_cap >= (100 << 20) else (8 << 20)


def _choose_rows_per_block(h, row_bytes, tile_budget_bytes):
    """Pick R (rows of the image per output tile).

    R is bounded by the VMEM tile budget; we additionally prefer >= 4-8 grid
    steps (so v7x's two TensorCores both get work and output writeback
    pipelines) as long as each tile still covers >= 1 MiB (amortizing the
    ~0.35 us per-step overhead). R does NOT need to divide H (cdiv grid).
    """
    r = max(1, tile_budget_bytes // row_bytes)
    r = min(r, h)
    min_tile_bytes = 1 << 20
    for steps in (8, 4, 2):
        r_alt = -(-h // steps)          # ceil(h / steps)
        if r_alt * row_bytes >= min_tile_bytes:
            r = min(r, r_alt)
            break
    if r < h and r >= 8:
        r = (r // 8) * 8                # sublane-aligned 2-D pos_y blocks
    return max(1, r)


# ---------------------------------------------------------------------------
# Wrapper
# ---------------------------------------------------------------------------
def _sincos_table(length, N, temperature, scale_factor):
    """(length, N) table: channel c even -> sin(embed/dim_t[c]), odd -> cos.

    Matches the torch stack(sin(even), cos(odd)) + flatten ordering exactly
    (dim_t is equal on channel pairs 2k, 2k+1 because of floor(c/2)).
    """
    idx = jnp.arange(N, dtype=jnp.float32)
    dim_t = jnp.asarray(temperature, jnp.float32) ** (2.0 * jnp.floor(idx / 2.0) / N)
    embed = (jnp.arange(length, dtype=jnp.float32) + 1.0) * scale_factor
    arg = embed[:, None] / dim_t[None, :]
    return jnp.where((jnp.arange(N) % 2) == 0, jnp.sin(arg), jnp.cos(arg))


def position_embedding_sine_hw(x, *, num_pos_feats=256, temperatureH=10000,
                               temperatureW=10000, normalize=False, scale=None,
                               dtype=jnp.float32, tile_budget_bytes=None):
    """JAX/Pallas equivalent of PositionEmbeddingSineHW.forward.

    x: (B, C, H, W) array (NCHW; only its shape is used).
    Returns pos of shape (1, H*W, C), C == 2 * num_pos_feats.
    """
    if scale is not None and normalize is False:
        raise ValueError('normalize should be True if scale is passed')
    if scale is None:
        scale = 2 * math.pi

    b, c, h, w = x.shape
    N = num_pos_feats
    assert c == 2 * N, "channel dim must equal 2*num_pos_feats (required by the .view in torch)"
    C = 2 * N

    # The module builds an all-ones mask, so cumsum == index+1 and the
    # normalization reduces to a constant per-axis scale.
    # TODO(synk): a real padding mask would need per-position cumsums instead.
    y_scale = float(scale / (h + 1e-6)) if normalize else 1.0
    x_scale = float(scale / (w + 1e-6)) if normalize else 1.0

    # Tiny O((H+W)*N) tables — the only transcendental work in the whole op.
    pos_y_tab = _sincos_table(h, N, temperatureH, y_scale)   # (h, N) f32
    pos_x_tab = _sincos_table(w, N, temperatureW, x_scale)   # (w, N) f32

    itemsize = jnp.dtype(dtype).itemsize
    vmem_cap = _vmem_capacity_bytes()
    if tile_budget_bytes is None:
        tile_budget_bytes = _default_tile_budget(vmem_cap)

    row_bytes = w * C * itemsize
    R = _choose_rows_per_block(h, row_bytes, tile_budget_bytes)
    grid = (pl.cdiv(h, R),)

    # 2-D pos_y blocks need a sublane-aligned row count (multiple of 8) or the
    # full H; otherwise fall back to a (H, 1, N) layout (any R is then legal
    # because the last two block dims equal the full array dims).
    posy_2d = (R % 8 == 0) or (R == h)
    if posy_2d:
        posy_in = pos_y_tab
        posy_spec = pl.BlockSpec((R, N), lambda i: (i, 0))
    else:
        posy_in = pos_y_tab.reshape(h, 1, N)
        posy_spec = pl.BlockSpec((R, 1, N), lambda i: (i, 0, 0))

    out_tile_bytes = R * w * C * itemsize
    vmem_limit = int(min(max(2 * out_tile_bytes + (8 << 20), 16 << 20), vmem_cap))

    kernel = functools.partial(_pos_embed_kernel, N=N)
    cost = pl.CostEstimate(
        flops=0,
        transcendentals=0,
        bytes_accessed=int(h * w * C * itemsize + (h + w) * N * 4),
    )

    out = pl.pallas_call(
        kernel,
        out_shape=jax.ShapeDtypeStruct((h, w, C), dtype),
        grid=grid,
        in_specs=[
            posy_spec,                                   # pos_y rows for this block
            pl.BlockSpec((w, N), lambda i: (0, 0)),      # pos_x (constant per step)
        ],
        out_specs=pl.BlockSpec((R, w, C), lambda i: (i, 0, 0)),
        compiler_params=pltpu.CompilerParams(
            dimension_semantics=("parallel",),
            vmem_limit_bytes=vmem_limit,
        ),
        cost_estimate=cost,
    )(posy_in, pos_x_tab)

    # (H, W, C) row-major is already the h*W + w flattening; reshape is free.
    return out.reshape(1, h * w, C)


@functools.lru_cache(maxsize=128)
def _cached_pos_embedding(h, w, num_pos_feats, temperatureH, temperatureW,
                          normalize, scale, dtype_name):
    """Shape-keyed cache: the output is a pure function of static parameters,
    so in steady state the HBM write can be eliminated entirely by reusing it."""
    dummy = jnp.zeros((1, 2 * num_pos_feats, h, w), jnp.float32)
    return jax.block_until_ready(position_embedding_sine_hw(
        dummy, num_pos_feats=num_pos_feats, temperatureH=temperatureH,
        temperatureW=temperatureW, normalize=normalize, scale=scale,
        dtype=jnp.dtype(dtype_name)))


# ---------------------------------------------------------------------------
# Pure-JAX reference (transliteration of the PyTorch forward)
# ---------------------------------------------------------------------------
def _reference(x, *, num_pos_feats, temperatureH=10000, temperatureW=10000,
               normalize=False, scale=None):
    if scale is None:
        scale = 2 * math.pi
    b, c, h, w = x.shape
    N = num_pos_feats
    not_mask = jnp.ones((1, h, w), jnp.float32)
    y_embed = jnp.cumsum(not_mask, axis=1)
    x_embed = jnp.cumsum(not_mask, axis=2)
    if normalize:
        eps = 1e-6
        y_embed = y_embed / (y_embed[:, -1:, :] + eps) * scale
        x_embed = x_embed / (x_embed[:, :, -1:] + eps) * scale
    idx = jnp.arange(N, dtype=jnp.float32)
    dim_tx = temperatureW ** (2.0 * jnp.floor(idx / 2.0) / N)
    dim_ty = temperatureH ** (2.0 * jnp.floor(idx / 2.0) / N)
    pos_x = x_embed[:, :, :, None] / dim_tx
    pos_y = y_embed[:, :, :, None] / dim_ty
    pos_x = jnp.stack((jnp.sin(pos_x[:, :, :, 0::2]),
                       jnp.cos(pos_x[:, :, :, 1::2])), axis=4).reshape(1, h, w, N)
    pos_y = jnp.stack((jnp.sin(pos_y[:, :, :, 0::2]),
                       jnp.cos(pos_y[:, :, :, 1::2])), axis=4).reshape(1, h, w, N)
    pos = jnp.concatenate((pos_y, pos_x), axis=3).transpose(0, 3, 1, 2)
    pos = pos.reshape(1, c, h * w).transpose(0, 2, 1)
    return pos


if __name__ == "__main__":
    key = jax.random.PRNGKey(0)

    # --- base config (N=32 -> C=64; N not a multiple of 128 -> full-tile store path)
    B, H, W = 2, 16, 16
    N = 32
    C = 2 * N
    x = jax.random.normal(key, (B, C, H, W), dtype=jnp.float32)

    pos = jax.block_until_ready(position_embedding_sine_hw(x, num_pos_feats=N))
    ref = _reference(x, num_pos_feats=N)
    assert pos.shape == (1, H * W, C), pos.shape
    assert jnp.allclose(pos, ref, atol=1e-5, rtol=1e-5), "mismatch vs reference"

    pos_n = jax.block_until_ready(position_embedding_sine_hw(
        x, num_pos_feats=N, normalize=True))
    ref_n = _reference(x, num_pos_feats=N, normalize=True)
    assert jnp.allclose(pos_n, ref_n, atol=1e-5, rtol=1e-5), "mismatch (normalize)"

    # --- H not divisible by the row block: cdiv grid + partial last output block
    H2, W2 = 37, 24
    x2 = jax.random.normal(key, (1, C, H2, W2), dtype=jnp.float32)
    pos2 = jax.block_until_ready(position_embedding_sine_hw(
        x2, num_pos_feats=N, tile_budget_bytes=64 << 10))
    ref2 = _reference(x2, num_pos_feats=N)
    assert jnp.allclose(pos2, ref2, atol=1e-5, rtol=1e-5), "mismatch (partial block)"

    # --- tiny rows-per-block (R < 8 -> 3-D pos_y layout fallback)
    H3, W3 = 5, 16
    x3 = jax.random.normal(key, (1, C, H3, W3), dtype=jnp.float32)
    pos3 = jax.block_until_ready(position_embedding_sine_hw(
        x3, num_pos_feats=N, tile_budget_bytes=1 << 10))
    ref3 = _reference(x3, num_pos_feats=N)
    assert jnp.allclose(pos3, ref3, atol=1e-5, rtol=1e-5), "mismatch (R<8 fallback)"

    # --- lane-aligned half-slab store path (N % 128 == 0)
    N4, H4, W4 = 128, 8, 8
    x4 = jax.random.normal(key, (1, 2 * N4, H4, W4), dtype=jnp.float32)
    pos4 = jax.block_until_ready(position_embedding_sine_hw(x4, num_pos_feats=N4))
    ref4 = _reference(x4, num_pos_feats=N4)
    assert jnp.allclose(pos4, ref4, atol=1e-5, rtol=1e-5), "mismatch (N%128==0)"

    # --- cached (shape-only) variant returns the same result
    cached = _cached_pos_embedding(H, W, N, 10000, 10000, False, None, "float32")
    assert jnp.allclose(cached, ref, atol=1e-5, rtol=1e-5), "mismatch (cached)"

    print("KERNEL_OK")
</pallas_src>

<mosaic_0001>
module attributes {stable_mosaic.version = 11 : i64} {
  func.func @_pos_embed_kernel(%arg0: i32, %arg1: memref<16x32xf32, #tpu.memory_space<vmem>>, %arg2: memref<16x32xf32, #tpu.memory_space<vmem>>, %arg3: memref<16x16x64xf32, #tpu.memory_space<vmem>>) attributes {dimension_semantics = [#tpu.dimension_semantics<parallel>], iteration_bounds = array<i64: 1>, scalar_prefetch = 0 : i64, scratch_operands = 0 : i64, tpu.core_type = #tpu.core_type<tc>, window_params = [{transform_indices = @transform_0, window_bounds = array<i64: 16, 32>}, {pipeline_mode = #tpu.pipeline_mode<synchronous>, transform_indices = @transform_1, window_bounds = array<i64: 16, 32>}, {transform_indices = @transform_2, window_bounds = array<i64: 16, 16, 64>}]} {
    %c0 = arith.constant 0 : index
    %c0_0 = arith.constant 0 : index
    %0 = vector.load %arg1[%c0, %c0_0] : memref<16x32xf32, #tpu.memory_space<vmem>>, vector<16x32xf32>
    %c0_1 = arith.constant 0 : index
    %c0_2 = arith.constant 0 : index
    %1 = vector.load %arg2[%c0_1, %c0_2] : memref<16x32xf32, #tpu.memory_space<vmem>>, vector<16x32xf32>
    %2 = vector.shape_cast %0 : vector<16x32xf32> to vector<16x1x32xf32>
    %3 = vector.shape_cast %2 : vector<16x1x32xf32> to vector<16x1x32xf32>
    %4 = vector.broadcast %3 : vector<16x1x32xf32> to vector<16x16x32xf32>
    %5 = vector.shape_cast %1 : vector<16x32xf32> to vector<1x16x32xf32>
    %6 = vector.shape_cast %5 : vector<1x16x32xf32> to vector<1x16x32xf32>
    %7 = vector.broadcast %6 : vector<1x16x32xf32> to vector<16x16x32xf32>
    %8 = tpu.concatenate %4, %7 in 2 : vector<16x16x32xf32>, vector<16x16x32xf32> -> vector<16x16x64xf32>
    %c0_3 = arith.constant 0 : index
    %c0_4 = arith.constant 0 : index
    %c0_5 = arith.constant 0 : index
    %9 = vector.load %arg3[%c0_3, %c0_4, %c0_5] : memref<16x16x64xf32, #tpu.memory_space<vmem>>, vector<16x16x64xf32>
    tpu.vector_store %arg3[%c0_3, %c0_4, %c0_5], %8 {strides = array<i32>} : memref<16x16x64xf32, #tpu.memory_space<vmem>>, vector<16x16x64xf32>,
    return
  }
  func.func @transform_0(%arg0: i32) -> (i32, i32) {
    %c0_i32 = arith.constant 0 : i32
    %c0_i32_0 = arith.constant 0 : i32
    return %arg0, %c0_i32 : i32, i32
  }
  func.func @transform_1(%arg0: i32) -> (i32, i32) {
    %c0_i32 = arith.constant 0 : i32
    %c0_i32_0 = arith.constant 0 : i32
    %c0_i32_1 = arith.constant 0 : i32
    return %c0_i32, %c0_i32_0 : i32, i32
  }
  func.func @transform_2(%arg0: i32) -> (i32, i32, i32) {
    %c0_i32 = arith.constant 0 : i32
    %c0_i32_0 = arith.constant 0 : i32
    %c0_i32_1 = arith.constant 0 : i32
    return %arg0, %c0_i32, %c0_i32_0 : i32, i32, i32
  }
}

</mosaic_0001>

<llo_original>
// kernel: tpu_custom_call.1
$region0: #{tpu_custom_call.1}
  #allocation0 [shape = 'u32[]', space=smem, size = 0x4, offset = 0x4, fixed_abs, tag = 'smem constant byte address 0x4 - core index']
  #allocation1 [shape = 'u32[144,128]{1,0:T(1,128)}', space=vmem, size = 0x12000, scoped, tag = 'internal scratch']
  %s0 = inlined_call_operand.hbm [shape: f32[16,32], index: 0, kind: input, shape index: {}]
  %s1 = inlined_call_operand.hbm [shape: f32[16,32], index: 1, kind: input, shape index: {}]
  %s2 = inlined_call_operand.hbm [shape: f32[16,16,64], index: 2, kind: output, shape index: {}]
  %s3 = sld [smem:[#allocation0]]
  $region26: #{tpu_custom_call.1} parent=0
    _
  %s5 = ssub.s32 1, %s3
  %s6 = scalar_select 0, %s5, %s3
  $region1: #{tpu_custom_call.1} parent=0
    #allocation2 [shape = 'u8[8192]{0}', space=vmem, size = 0x2000, scoped, tag = 'input window, operand 0, single buffered']
    #allocation3 [shape = 's32[1]{0}', space=sflag, size = 0x4, scoped, tag = 'scoped memory for tpu_custom_call.1']
    #allocation4 [shape = 's32[1]{0}', space=sflag, size = 0x4, scoped, tag = 'scoped memory for tpu_custom_call.1']
    #allocation5 [shape = 'u8[8192]{0}', space=vmem, size = 0x2000, scoped, tag = 'input window, operand 1, single buffered']
    #allocation6 [shape = 's32[1]{0}', space=sflag, size = 0x4, scoped, tag = 'scoped memory for tpu_custom_call.1']
    #allocation7 [shape = 'u8[131072]{0}', space=vmem, size = 0x20000, scoped, tag = 'output window, operand 0, single buffered']
    %7 = vsyncpa [#allocation3], 0
    %8 = vsyncpa [#allocation6], 0
    %9 = vsyncpa [#allocation4], 0
    // Predicated region
    $region2: #{tpu_custom_call.1} parent=1 // pred_check
      _
    $region3: #{tpu_custom_call.1} parent=1 // pred_check_branch
      %11 = sbr.rel (0) target = $region5
    $region4: #{tpu_custom_call.1} parent=1 // pred_region
      %s13 = ssub.s32 256, 256
      %14 = vsyncadd [#allocation3], %s13
      %s15 = sshll.u32 [#allocation2], 4
      %s16 = int_to_ptr.vmem [resolvable:$true] %s15
      %21 = dma.hbm_to_vmem [thread:$0]  %s0, 256, %s16, [#allocation3], 128, 128, 8
    $region5: #{tpu_custom_call.1} parent=1 // pred_fallthru
      _
    // Predicated region
    $region6: #{tpu_custom_call.1} parent=1 // pred_check
      _
    $region7: #{tpu_custom_call.1} parent=1 // pred_check_branch
      %23 = sbr.rel (0) target = $region9
    $region8: #{tpu_custom_call.1} parent=1 // pred_region
      %s25 = ssub.s32 256, 256
      %26 = vsyncadd [#allocation6], %s25
      %s27 = sshll.u32 [#allocation5], 4
      %s28 = int_to_ptr.vmem [resolvable:$true] %s27
      %33 = dma.hbm_to_vmem [thread:$0]  %s1, 256, %s28, [#allocation6], 128, 128, 8
    $region9: #{tpu_custom_call.1} parent=1 // pred_fallthru
      _
    // Predicated region
    $region10: #{tpu_custom_call.1} parent=1 // pred_check
      _
    $region11: #{tpu_custom_call.1} parent=1 // pred_check_branch
      %35 = sbr.rel (0) target = $region13
    $region12: #{tpu_custom_call.1} parent=1 // pred_region
      %36 = dma.done [#allocation3], 256
    $region13: #{tpu_custom_call.1} parent=1 // pred_fallthru
      _
    // Predicated region
    $region14: #{tpu_custom_call.1} parent=1 // pred_check
      _
    $region15: #{tpu_custom_call.1} parent=1 // pred_check_branch
      %38 = sbr.rel (0) target = $region17
    $region16: #{tpu_custom_call.1} parent=1 // pred_region
      %39 = dma.done [#allocation6], 256
    $region17: #{tpu_custom_call.1} parent=1 // pred_fallthru
      _
    %v40 = vld [vmem:[#allocation2] sm:$0xff]
    %v41 = vld [vmem:[#allocation2 + $0x8] sm:$0xff]
    %v42 = vld [vmem:[#allocation5] sm:$0xff]
    %v43 = vld [vmem:[#allocation5 + $0x8] sm:$0xff]
    %v46 = vcombine.high %v40, %v40
    %v48 = vunpack.c.l.s4 1966171168
    %v49 = vunpack.c.0.s8 %v48
    %v50 = vlaneseq
    %v51 = vshrl.u32 %v50, 7
    %v52 = vsub.s32 %v49, %v51
    %v53 = vrot.slane %v40, %v52
    %v55 = vunpack.c.l.s4 1966171168
    %v56 = vunpack.c.0.s8 %v55
    %v57 = vlaneseq
    %v58 = vshrl.u32 %v57, 7
    %v59 = vsub.s32 %v56, %v58
    %v60 = vrot.slane %v46, %v59
    %v61 = vcombine.high %v53, %v53
    %v62 = vcombine.high %v60, %v60
    %v64 = vunpack.c.l.s4 1966171168
    %v65 = vunpack.c.0.s8 %v64
    %v66 = vlaneseq
    %v67 = vshrl.u32 %v66, 7
    %v68 = vsub.s32 %v65, %v67
    %v69 = vrot.slane %v53, %v68
    %v71 = vunpack.c.l.s4 1966171168
    %v72 = vunpack.c.0.s8 %v71
    %v73 = vlaneseq
    %v74 = vshrl.u32 %v73, 7
    %v75 = vsub.s32 %v72, %v74
    %v76 = vrot.slane %v60, %v75
    %v78 = vunpack.c.l.s4 1966171168
    %v79 = vunpack.c.0.s8 %v78
    %v80 = vlaneseq
    %v81 = vshrl.u32 %v80, 7
    %v82 = vsub.s32 %v79, %v81
    %v83 = vrot.slane %v61, %v82
    %v85 = vunpack.c.l.s4 1966171168
    %v86 = vunpack.c.0.s8 %v85
    %v87 = vlaneseq
    %v88 = vshrl.u32 %v87, 7
    %v89 = vsub.s32 %v86, %v88
    %v90 = vrot.slane %v62, %v89
    %v91 = vcombine.high %v69, %v69
    %v92 = vcombine.high %v76, %v76
    %v93 = vcombine.high %v83, %v83
    %v94 = vcombine.high %v90, %v90
    %v95 = vcombine.high %v41, %v41
    %v97 = vunpack.c.l.s4 1966171168
    %v98 = vunpack.c.0.s8 %v97
    %v99 = vlaneseq
    %v100 = vshrl.u32 %v99, 7
    %v101 = vsub.s32 %v98, %v100
    %v102 = vrot.slane %v41, %v101
    %v104 = vunpack.c.l.s4 1966171168
    %v105 = vunpack.c.0.s8 %v104
    %v106 = vlaneseq
    %v107 = vshrl.u32 %v106, 7
    %v108 = vsub.s32 %v105, %v107
    %v109 = vrot.slane %v95, %v108
    %v110 = vcombine.high %v102, %v102
    %v111 = vcombine.high %v109, %v109
    %v113 = vunpack.c.l.s4 1966171168
    %v114 = vunpack.c.0.s8 %v113
    %v115 = vlaneseq
    %v116 = vshrl.u32 %v115, 7
    %v117 = vsub.s32 %v114, %v116
    %v118 = vrot.slane %v102, %v117
    %v120 = vunpack.c.l.s4 1966171168
    %v121 = vunpack.c.0.s8 %v120
    %v122 = vlaneseq
    %v123 = vshrl.u32 %v122, 7
    %v124 = vsub.s32 %v121, %v123
    %v125 = vrot.slane %v109, %v124
    %v127 = vunpack.c.l.s4 1966171168
    %v128 = vunpack.c.0.s8 %v127
    %v129 = vlaneseq
    %v130 = vshrl.u32 %v129, 7
    %v131 = vsub.s32 %v128, %v130
    %v132 = vrot.slane %v110, %v131
    %v134 = vunpack.c.l.s4 1966171168
    %v135 = vunpack.c.0.s8 %v134
    %v136 = vlaneseq
    %v137 = vshrl.u32 %v136, 7
    %v138 = vsub.s32 %v135, %v137
    %v139 = vrot.slane %v111, %v138
    %v140 = vcombine.high %v118, %v118
    %v141 = vcombine.high %v125, %v125
    %v142 = vcombine.high %v132, %v132
    %v143 = vcombine.high %v139, %v139
    %v144 = vlaneseq
    %v145 = vshrl.u32 %v144, 7
    %v146 = vsub.s32 0, %v145
    %v147 = vrot.slane %v69, %v146
    %v148 = vlaneseq
    %v149 = vshrl.u32 %v148, 7
    %v150 = vsub.s32 0, %v149
    %v151 = vrot.slane %v83, %v150
    %v152 = vlaneseq
    %v153 = vshrl.u32 %v152, 7
    %v154 = vsub.s32 0, %v153
    %v155 = vrot.slane %v91, %v154
    %v156 = vlaneseq
    %v157 = vshrl.u32 %v156, 7
    %v158 = vsub.s32 0, %v157
    %v159 = vrot.slane %v93, %v158
    %v160 = vlaneseq
    %v161 = vshrl.u32 %v160, 7
    %v162 = vsub.s32 0, %v161
    %v163 = vrot.slane %v76, %v162
    %v164 = vlaneseq
    %v165 = vshrl.u32 %v164, 7
    %v166 = vsub.s32 0, %v165
    %v167 = vrot.slane %v90, %v166
    %v168 = vlaneseq
    %v169 = vshrl.u32 %v168, 7
    %v170 = vsub.s32 0, %v169
    %v171 = vrot.slane %v92, %v170
    %v172 = vlaneseq
    %v173 = vshrl.u32 %v172, 7
    %v174 = vsub.s32 0, %v173
    %v175 = vrot.slane %v94, %v174
    %v176 = vlaneseq
    %v177 = vshrl.u32 %v176, 7
    %v178 = vsub.s32 0, %v177
    %v179 = vrot.slane %v118, %v178
    %v180 = vlaneseq
    %v181 = vshrl.u32 %v180, 7
    %v182 = vsub.s32 0, %v181
    %v183 = vrot.slane %v132, %v182
    %v184 = vlaneseq
    %v185 = vshrl.u32 %v184, 7
    %v186 = vsub.s32 0, %v185
    %v187 = vrot.slane %v140, %v186
    %v188 = vlaneseq
    %v189 = vshrl.u32 %v188, 7
    %v190 = vsub.s32 0, %v189
    %v191 = vrot.slane %v142, %v190
    %v192 = vlaneseq
    %v193 = vshrl.u32 %v192, 7
    %v194 = vsub.s32 0, %v193
    %v195 = vrot.slane %v125, %v194
    %v196 = vlaneseq
    %v197 = vshrl.u32 %v196, 7
    %v198 = vsub.s32 0, %v197
    %v199 = vrot.slane %v139, %v198
    %v200 = vlaneseq
    %v201 = vshrl.u32 %v200, 7
    %v202 = vsub.s32 0, %v201
    %v203 = vrot.slane %v141, %v202
    %v204 = vlaneseq
    %v205 = vshrl.u32 %v204, 7
    %v206 = vsub.s32 0, %v205
    %v207 = vrot.slane %v143, %v206
    %226 = vrot.lane.b32.xlu0 %v42, 32
    %v227 = vpop.permute.xlu0 %226
    %228 = vrot.lane.b32.xlu0 %v43, 32
    %v229 = vpop.permute.xlu0 %228
    %vm232 = vcmask 261120
    %v233 = vsel %vm232, %v147, %v227
    %v234 = vsel %vm232, %v147, %v229
    %v235 = vsel %vm232, %v151, %v227
    %v236 = vsel %vm232, %v151, %v229
    %v237 = vsel %vm232, %v155, %v227
    %v238 = vsel %vm232, %v155, %v229
    %v239 = vsel %vm232, %v159, %v227
    %v240 = vsel %vm232, %v159, %v229
    %v241 = vsel %vm232, %v163, %v227
    %v242 = vsel %vm232, %v163, %v229
    %v243 = vsel %vm232, %v167, %v227
    %v244 = vsel %vm232, %v167, %v229
    %v245 = vsel %vm232, %v171, %v227
    %v246 = vsel %vm232, %v171, %v229
    %v247 = vsel %vm232, %v175, %v227
    %v248 = vsel %vm232, %v175, %v229
    %v249 = vsel %vm232, %v179, %v227
    %v250 = vsel %vm232, %v179, %v229
    %v251 = vsel %vm232, %v183, %v227
    %v252 = vsel %vm232, %v183, %v229
    %v253 = vsel %vm232, %v187, %v227
    %v254 = vsel %vm232, %v187, %v229
    %v255 = vsel %vm232, %v191, %v227
    %v256 = vsel %vm232, %v191, %v229
    %v257 = vsel %vm232, %v195, %v227
    %v258 = vsel %vm232, %v195, %v229
    %v259 = vsel %vm232, %v199, %v227
    %v260 = vsel %vm232, %v199, %v229
    %v261 = vsel %vm232, %v203, %v227
    %v262 = vsel %vm232, %v203, %v229
    %v263 = vsel %vm232, %v207, %v227
    %v264 = vsel %vm232, %v207, %v229
    %vm265 = vcmask 523264
    %266 = vst.msk [vmem:[#allocation7] sm:$0xff] %vm265, %v233
    %267 = vst.msk [vmem:[#allocation7 + $0x8] sm:$0xff] %vm265, %v234
    %268 = vst.msk [vmem:[#allocation7 + $0x10] sm:$0xff] %vm265, %v235
    %269 = vst.msk [vmem:[#allocation7 + $0x18] sm:$0xff] %vm265, %v236
    %270 = vst.msk [vmem:[#allocation7 + $0x20] sm:$0xff] %vm265, %v237
    %271 = vst.msk [vmem:[#allocation7 + $0x28] sm:$0xff] %vm265, %v238
    %272 = vst.msk [vmem:[#allocation7 + $0x30] sm:$0xff] %vm265, %v239
    %273 = vst.msk [vmem:[#allocation7 + $0x38] sm:$0xff] %vm265, %v240
    %274 = vst.msk [vmem:[#allocation7 + $0x40] sm:$0xff] %vm265, %v241
    %275 = vst.msk [vmem:[#allocation7 + $0x48] sm:$0xff] %vm265, %v242
    %276 = vst.msk [vmem:[#allocation7 + $0x50] sm:$0xff] %vm265, %v243
    %277 = vst.msk [vmem:[#allocation7 + $0x58] sm:$0xff] %vm265, %v244
    %278 = vst.msk [vmem:[#allocation7 + $0x60] sm:$0xff] %vm265, %v245
    %279 = vst.msk [vmem:[#allocation7 + $0x68] sm:$0xff] %vm265, %v246
    %280 = vst.msk [vmem:[#allocation7 + $0x70] sm:$0xff] %vm265, %v247
    %281 = vst.msk [vmem:[#allocation7 + $0x78] sm:$0xff] %vm265, %v248
    %282 = vst.msk [vmem:[#allocation7 + $0x80] sm:$0xff] %vm265, %v249
    %283 = vst.msk [vmem:[#allocation7 + $0x88] sm:$0xff] %vm265, %v250
    %284 = vst.msk [vmem:[#allocation7 + $0x90] sm:$0xff] %vm265, %v251
    %285 = vst.msk [vmem:[#allocation7 + $0x98] sm:$0xff] %vm265, %v252
    %286 = vst.msk [vmem:[#allocation7 + $0xa0] sm:$0xff] %vm265, %v253
    %287 = vst.msk [vmem:[#allocation7 + $0xa8] sm:$0xff] %vm265, %v254
    %288 = vst.msk [vmem:[#allocation7 + $0xb0] sm:$0xff] %vm265, %v255
    %289 = vst.msk [vmem:[#allocation7 + $0xb8] sm:$0xff] %vm265, %v256
    %290 = vst.msk [vmem:[#allocation7 + $0xc0] sm:$0xff] %vm265, %v257
    %291 = vst.msk [vmem:[#allocation7 + $0xc8] sm:$0xff] %vm265, %v258
    %292 = vst.msk [vmem:[#allocation7 + $0xd0] sm:$0xff] %vm265, %v259
    %293 = vst.msk [vmem:[#allocation7 + $0xd8] sm:$0xff] %vm265, %v260
    %294 = vst.msk [vmem:[#allocation7 + $0xe0] sm:$0xff] %vm265, %v261
    %295 = vst.msk [vmem:[#allocation7 + $0xe8] sm:$0xff] %vm265, %v262
    %296 = vst.msk [vmem:[#allocation7 + $0xf0] sm:$0xff] %vm265, %v263
    %297 = vst.msk [vmem:[#allocation7 + $0xf8] sm:$0xff] %vm265, %v264
    // Predicated region
    $region18: #{tpu_custom_call.1} parent=1 // pred_check
      _
    $region19: #{tpu_custom_call.1} parent=1 // pred_check_branch
      %299 = sbr.rel (0) target = $region21
    $region20: #{tpu_custom_call.1} parent=1 // pred_region
      %s301 = ssub.s32 4096, 4096
      %302 = vsyncadd [#allocation4], %s301
      %s303 = sshll.u32 [#allocation7], 4
      %s304 = int_to_ptr.vmem [resolvable:$true] %s303
      %309 = dma.vmem_to_hbm [thread:$0]  %s304, 4096, %s2, [#allocation4], 128, 128, 8
    $region21: #{tpu_custom_call.1} parent=1 // pred_fallthru
      _
    // Predicated region
    $region22: #{tpu_custom_call.1} parent=1 // pred_check
      _
    $region23: #{tpu_custom_call.1} parent=1 // pred_check_branch
      %311 = sbr.rel (0) target = $region25
    $region24: #{tpu_custom_call.1} parent=1 // pred_region
      %312 = dma.done [#allocation4], 4096
    $region25: #{tpu_custom_call.1} parent=1 // pred_fallthru
      _
    %313 = vsyncpa [#allocation3], 1
    %314 = vsyncpa [#allocation6], 1
    %315 = vsyncpa [#allocation4], 1

</llo_original>
